<compile_context>
chip_gen: v7x
topology: tpu7x:2x2x1
jax: 0.10.0
libtpu: 0.0.40
codegen_flags: <defaults>
</compile_context>

<pallas_src>
import jax
import jax.numpy as jnp
from jax.experimental import pallas as pl
from jax.experimental.pallas import tpu as pltpu


def _chunk_rows(rows: int, granule: int, max_chunks: int = 4):
    """Split `rows` into <= max_chunks contiguous chunks with boundaries on
    multiples of `granule` (packed-sublane granule for the dtype). Any
    non-granule tail is folded into the last chunk."""
    units = rows // granule
    if units < 2:
        return [rows]
    n_chunks = min(max_chunks, units)
    base, rem = divmod(units, n_chunks)
    sizes = [(base + (1 if i < rem else 0)) * granule for i in range(n_chunks)]
    sizes[-1] += rows - units * granule
    return sizes


def _lane_dense_view(n_elems: int, batch: int, features: int):
    """Pick a 2-D view of the flat buffer: lane-dense (R, L) with L a multiple
    of 128 if possible, otherwise the plain (B, F) view (fine for DMA)."""
    for cand in (1024, 512, 256, 128):
        if n_elems % cand == 0:
            return n_elems // cand, cand
    return batch, features


def _make_dma_flatten_kernel(chunk_sizes):
    """Kernel factory: direct HBM->HBM copy in `len(chunk_sizes)` overlapped
    DMAs. All sizes/offsets are static Python ints (traced once)."""
    offsets = []
    off = 0
    for s in chunk_sizes:
        offsets.append(off)
        off += s

    def kernel(x_hbm, o_hbm, sems):
        copies = []
        for i, (start, size) in enumerate(zip(offsets, chunk_sizes)):
            cp = pltpu.make_async_copy(
                x_hbm.at[pl.ds(start, size)],
                o_hbm.at[pl.ds(start, size)],
                sems.at[i],
            )
            cp.start()          # issue all DMAs first (overlap in flight) ...
            copies.append(cp)
        for cp in copies:       # ... then wait on all of them
            cp.wait()

    return kernel


def flatten_pallas(x: jax.Array, *, copy: bool = True) -> jax.Array:
    """Equivalent of `x.view(x.size(0), -1)`.

    copy=False: zero-cost metadata reshape (use when the caller can donate /
                does not need a distinct output buffer) — the true equivalent
                of torch's `.view`.
    copy=True : materializes a fresh output buffer via a direct HBM->HBM DMA
                Pallas kernel (pure bandwidth op, no VMEM staging).
    """
    B = x.shape[0]
    F = 1
    for d in x.shape[1:]:
        F *= d

    if not copy:
        return jnp.reshape(x, (B, F))

    n = B * F
    itemsize = jnp.dtype(x.dtype).itemsize
    R, L = _lane_dense_view(n, B, F)
    granule = max(8, 32 // itemsize)          # 8 (f32) / 16 (bf16) / 32 (int8)
    chunks = _chunk_rows(R, granule)

    x2 = jnp.reshape(x, (R, L))               # metadata-only on contiguous input
    out2 = pl.pallas_call(
        _make_dma_flatten_kernel(chunks),
        out_shape=jax.ShapeDtypeStruct((R, L), x.dtype),
        in_specs=[pl.BlockSpec(memory_space=pl.ANY)],    # raw HBM ref in
        out_specs=pl.BlockSpec(memory_space=pl.ANY),     # raw HBM ref out
        scratch_shapes=[pltpu.SemaphoreType.DMA((len(chunks),))],
        cost_estimate=pl.CostEstimate(
            flops=0, transcendentals=0, bytes_accessed=2 * n * itemsize),
    )(x2)
    return jnp.reshape(out2, (B, F))           # metadata-only


if __name__ == "__main__":
    key = jax.random.PRNGKey(0)

    # Small NCHW activation, as would feed the Flatten layer of a conv net.
    B, C, H, W = 2, 4, 16, 16
    x = jax.random.normal(key, (B, C, H, W), dtype=jnp.float32)
    out = jax.block_until_ready(flatten_pallas(x))
    ref = jnp.reshape(x, (B, C * H * W))
    assert out.shape == (B, C * H * W), out.shape
    assert out.dtype == x.dtype, out.dtype
    assert bool(jnp.array_equal(out, ref)), "mismatch vs. reference flatten"

    # Awkward shape: feature count not a multiple of 128 — same DMA path,
    # no special (previously VMEM-OOM-prone) fallback needed.
    x_odd = jax.random.normal(jax.random.PRNGKey(1), (2, 3, 5, 7),
                              dtype=jnp.float32)
    out_odd = jax.block_until_ready(flatten_pallas(x_odd))
    assert bool(jnp.array_equal(out_odd, jnp.reshape(x_odd, (2, 3 * 5 * 7))))

    # Multi-chunk path (several overlapped DMAs) + sub-32-bit dtype granule.
    x_big = jax.random.normal(jax.random.PRNGKey(2), (4, 8, 32, 32),
                              dtype=jnp.bfloat16)
    out_big = jax.block_until_ready(flatten_pallas(x_big))
    assert bool(jnp.array_equal(out_big, jnp.reshape(x_big, (4, 8 * 32 * 32))))

    # Donating / zero-copy path: exact torch `.view` semantics, no HBM traffic.
    out_view = jax.block_until_ready(flatten_pallas(x, copy=False))
    assert bool(jnp.array_equal(out_view, ref))

    print("KERNEL_OK")
</pallas_src>

<mosaic_0001>
module attributes {stable_mosaic.version = 11 : i64} {
  func.func @kernel(%arg0: memref<2x1024xf32, #tpu.memory_space<any>>, %arg1: memref<2x1024xf32, #tpu.memory_space<any>>, %arg2: memref<1x!tpu.dma_semaphore, #tpu.memory_space<semaphore_mem>>) attributes {dimension_semantics = [], scalar_prefetch = 0 : i64, scratch_operands = 1 : i64, tpu.core_type = #tpu.core_type<tc>} {
    %c0_i32 = arith.constant 0 : i32
    %c0_i32_0 = arith.constant 0 : i32
    %c0_i32_1 = arith.constant 0 : i32
    %0 = tpu.memref_slice %arg0[%c0_i32_0, %c0_i32_1] : memref<2x1024xf32, #tpu.memory_space<any>> -> memref<2x1024xf32, #tpu.memory_space<any>>
    %c0_i32_2 = arith.constant 0 : i32
    %c0_i32_3 = arith.constant 0 : i32
    %1 = tpu.memref_slice %arg1[%c0_i32_2, %c0_i32_3] : memref<2x1024xf32, #tpu.memory_space<any>> -> memref<2x1024xf32, #tpu.memory_space<any>>
    %2 = tpu.memref_slice %arg2[%c0_i32] : memref<1x!tpu.dma_semaphore, #tpu.memory_space<semaphore_mem>> -> memref<1x!tpu.dma_semaphore, #tpu.memory_space<semaphore_mem>>
    %3 = tpu.memref_squeeze %2 : memref<1x!tpu.dma_semaphore, #tpu.memory_space<semaphore_mem>> -> memref<!tpu.dma_semaphore, #tpu.memory_space<semaphore_mem>>
    tpu.enqueue_dma source(%0 : memref<2x1024xf32, #tpu.memory_space<any>>) target(%1 : memref<2x1024xf32, #tpu.memory_space<any>>) target_semaphore(%3 : memref<!tpu.dma_semaphore, #tpu.memory_space<semaphore_mem>>)
    %c0_i32_4 = arith.constant 0 : i32
    %c0_i32_5 = arith.constant 0 : i32
    %c0_i32_6 = arith.constant 0 : i32
    %4 = tpu.memref_slice %arg0[%c0_i32_5, %c0_i32_6] : memref<2x1024xf32, #tpu.memory_space<any>> -> memref<2x1024xf32, #tpu.memory_space<any>>
    %c0_i32_7 = arith.constant 0 : i32
    %c0_i32_8 = arith.constant 0 : i32
    %5 = tpu.memref_slice %arg1[%c0_i32_7, %c0_i32_8] : memref<2x1024xf32, #tpu.memory_space<any>> -> memref<2x1024xf32, #tpu.memory_space<any>>
    %6 = tpu.memref_slice %arg2[%c0_i32_4] : memref<1x!tpu.dma_semaphore, #tpu.memory_space<semaphore_mem>> -> memref<1x!tpu.dma_semaphore, #tpu.memory_space<semaphore_mem>>
    %7 = tpu.memref_squeeze %6 : memref<1x!tpu.dma_semaphore, #tpu.memory_space<semaphore_mem>> -> memref<!tpu.dma_semaphore, #tpu.memory_space<semaphore_mem>>
    tpu.wait_dma2 semaphore(%7 : memref<!tpu.dma_semaphore, #tpu.memory_space<semaphore_mem>>) src(%4 : memref<2x1024xf32, #tpu.memory_space<any>>) dst(%5 : memref<2x1024xf32, #tpu.memory_space<any>>)
    return
  }
}

</mosaic_0001>

<llo_original>
// kernel: tpu_custom_call.1
$region0: #{tpu_custom_call.1}
  #allocation0 [shape = 'u32[]', space=smem, size = 0x4, offset = 0x4, fixed_abs, tag = 'smem constant byte address 0x4 - core index']
  #allocation1 [shape = 'u32[144,128]{1,0:T(1,128)}', space=vmem, size = 0x12000, scoped, tag = 'internal scratch']
  #allocation2 [shape = 's32[1]{0}', space=sflag, size = 0x4, scoped, tag = 'scratch operand']
  #allocation3 [shape = 's32[]', space=sflag, size = 0x4, offset = 0, fixed_abs, tag = 'sflag constant byte address 0x0 - dummy sync flag']
  #allocation4 [shape = 'u32[0]{0}', space=smem, size = 0, offset = 0, fixed_abs, tag = 'smem constant byte address 0x0 - null']
  %s0 = inlined_call_operand.hbm [shape: f32[2,1024], index: 0, kind: input, shape index: {}]
  %s1 = inlined_call_operand.hbm [shape: f32[2,1024], index: 1, kind: output, shape index: {}]
  %s2 = sld [smem:[#allocation0]]
  $region2: #{tpu_custom_call.1} parent=0
    _
  %s4 = ssub.s32 1, %s2
  %s5 = scalar_select 0, %s4, %s2
  %s7 = sshll.u32 1, 14
  %s8 = sxor.u32 4294967295, %s7
  %s11 = sshll.u32 3, 24
  %s12 = sxor.u32 4294967295, %s11
  %s13 = sand.u32 0, %s12
  %s15 = sor.u32 %s13, 0
  %18 = dma.general %s0, 256, %s1, [#allocation2], [#allocation3], [#allocation4], %s15, 0
  %s19 = smul.u32 2, 1
  %s20 = smul.u32 %s19, 8
  %s21 = sshll.u32 %s20, 4
  %22 = dma.done [#allocation2], %s21
  %23 = vsyncmov [#allocation2]
  %s24 = vpop.sfrf %23
  %p25 = scmp.eq.s32.totalorder %s24, 0
  %p26 = pneg %p25
  %28 = shalt.err (%p26)

</llo_original>
